<compile_context>
chip_gen: v7x
topology: tpu7x:2x2x1
jax: 0.10.0
libtpu: 0.0.40
codegen_flags: <defaults>
</compile_context>

<pallas_src>
import jax
import jax.numpy as jnp
from jax.experimental import pallas as pl
from jax.experimental.pallas import tpu as pltpu

_LANES = 128
_SUBLANES = 8
_MAX_BLOCK_ROWS = 2048   # (1, 3, 2048, 128) f32 = 3 MiB; in+out double-buffered = 12 MiB
_MIN_BLOCK_ROWS = 256

# torchvision rgb_to_grayscale weights
_RW, _GW, _BW = 0.2989, 0.587, 0.114


def _cdiv(a, b):
    return -(-a // b)


def _saturation_kernel(factor_ref, img_ref, out_ref):
    # factor_ref: SMEM scalar-prefetch ref, shape (1,), float32
    # img_ref / out_ref: VMEM tiles of shape (1, 3, BH, BW)
    f = factor_ref[0]
    r = img_ref[0, 0].astype(jnp.float32)
    g = img_ref[0, 1].astype(jnp.float32)
    b = img_ref[0, 2].astype(jnp.float32)
    gray = r * _RW + g * _GW + b * _BW
    # torchvision _blend: f*c + (1-f)*gray == gray + f*(c - gray), then clamp to [0,1].
    out_ref[0, 0] = jnp.clip(gray + f * (r - gray), 0.0, 1.0).astype(out_ref.dtype)
    out_ref[0, 1] = jnp.clip(gray + f * (g - gray), 0.0, 1.0).astype(out_ref.dtype)
    out_ref[0, 2] = jnp.clip(gray + f * (b - gray), 0.0, 1.0).astype(out_ref.dtype)


def _pick_block_rows(rows, n):
    """Block rows for the lane-dense (rows, 128) layout.

    Fixed power-of-two sizes (never a divisor search), shrunk only so that
    (a) the block does not vastly exceed `rows` and (b) there are >= 4 grid
    points in total, keeping both v7x TensorCores busy even at N == 1."""
    if rows <= _MIN_BLOCK_ROWS:
        # Single block per image; block dim == full array dim is always legal.
        return rows
    br = _MAX_BLOCK_ROWS
    while br > _MIN_BLOCK_ROWS and (br >= 2 * rows or n * _cdiv(rows, br) < 4):
        br //= 2
    return br


def _fallback_block_h(H, W):
    """Block height for the rare (H*W % 128 != 0) path operating on (N,3,H,W)."""
    if H <= _SUBLANES:
        return H  # full dim (legal block shape even if not a multiple of 8)
    # ~3 MiB of f32 per block (3 channels), block rows a multiple of 8.
    cap = max(_SUBLANES, ((3 << 20) // (3 * W * 4)) // _SUBLANES * _SUBLANES)
    return max(_SUBLANES, min((H // _SUBLANES) * _SUBLANES, cap))


def _saturate_call(x, factor_arr, block, grid):
    N, C = x.shape[0], x.shape[1]
    blk = (1, C) + block
    return pl.pallas_call(
        _saturation_kernel,
        out_shape=jax.ShapeDtypeStruct(x.shape, x.dtype),
        grid_spec=pltpu.PrefetchScalarGridSpec(
            num_scalar_prefetch=1,            # factor lives in SMEM
            grid=grid,
            in_specs=[pl.BlockSpec(blk, lambda n, s, f_ref: (n, 0, s, 0))],
            out_specs=pl.BlockSpec(blk, lambda n, s, f_ref: (n, 0, s, 0)),
        ),
        compiler_params=pltpu.CompilerParams(
            dimension_semantics=("parallel", "parallel"),
        ),
    )(factor_arr, x)


def adjust_saturation_pallas(img, factor):
    """img: (N, 3, H, W) float in [0, 1]; factor: scalar."""
    N, C, H, W = img.shape
    assert C == 3, "adjust_saturation requires RGB (C == 3)"
    assert jnp.issubdtype(img.dtype, jnp.floating), "expects float image in [0, 1]"
    factor_arr = jnp.asarray(factor, jnp.float32).reshape((1,))

    S = H * W
    if S % _LANES == 0:
        # Common case: lane-dense layout via a free contiguous reshape (no pad,
        # no slice); ragged last block along `rows` is masked by Pallas.
        rows = S // _LANES
        x = img.reshape(N, C, rows, _LANES)
        br = _pick_block_rows(rows, N)
        out = _saturate_call(x, factor_arr, (br, _LANES), (N, _cdiv(rows, br)))
        return out.reshape(N, C, H, W)

    # Rare non-128-aligned spatial size: run directly on (N, 3, H, W) with the
    # full W as the lane dim (legal block shape); still zero extra HBM traffic.
    bh = _fallback_block_h(H, W)
    return _saturate_call(img, factor_arr, (bh, W), (N, _cdiv(H, bh)))


def _adjust_saturation_ref(img, factor):
    """Pure-JAX reference (torchvision semantics) for validation."""
    r, g, b = img[:, 0], img[:, 1], img[:, 2]
    gray = (_RW * r + _GW * g + _BW * b)[:, None]
    return jnp.clip(factor * img + (1.0 - factor) * gray, 0.0, 1.0)


def saturation_forward(img, key, bound=0.5, p=0.5, label=None):
    """Pallas equivalent of Saturation.forward. Randomness is drawn from `key`
    deterministically (replaces torch's global RNG). When the coin flip says
    "don't apply", the kernel is skipped entirely (no HBM round-trip)."""
    k_factor, k_coin = jax.random.split(key)
    factor = jax.random.uniform(
        k_factor, (), minval=1.0 - bound, maxval=1.0 + bound, dtype=jnp.float32
    )
    coin = jax.random.uniform(k_coin, (), dtype=jnp.float32)
    out = jax.lax.cond(
        coin < p,
        lambda im: adjust_saturation_pallas(im, factor),
        lambda im: im,
        img,
    )
    return out, label


if __name__ == "__main__":
    key = jax.random.PRNGKey(0)
    k_img, k_fwd = jax.random.split(key)

    # Small RGB batch: N=2, C=3, H=W=16, values in [0, 1] like a float image.
    img = jax.random.uniform(k_img, (2, 3, 16, 16), dtype=jnp.float32)

    # 1) Direct kernel check against the pure-JAX reference (lane-dense path,
    #    single small block per image).
    factor = jnp.float32(1.37)
    out_k = jax.block_until_ready(adjust_saturation_pallas(img, factor))
    ref = _adjust_saturation_ref(img, factor)
    assert out_k.shape == img.shape and out_k.dtype == img.dtype
    assert bool(jnp.allclose(out_k, ref, atol=1e-5, rtol=1e-5))

    # 2) Non-128-aligned spatial size -> direct (N,3,H,W) fallback path (no pad).
    img2 = jax.random.uniform(jax.random.PRNGKey(1), (2, 3, 17, 13), dtype=jnp.float32)
    out2 = jax.block_until_ready(adjust_saturation_pallas(img2, jnp.float32(0.6)))
    assert bool(jnp.allclose(out2, _adjust_saturation_ref(img2, jnp.float32(0.6)),
                             atol=1e-5, rtol=1e-5))

    # 3) 128-aligned spatial size with a ragged last block in the lane-dense path
    #    (rows=257, block rows=256 -> masked last block).
    img3 = jax.random.uniform(jax.random.PRNGKey(2), (1, 3, 257, 128), dtype=jnp.float32)
    out3 = jax.block_until_ready(adjust_saturation_pallas(img3, jnp.float32(0.55)))
    assert bool(jnp.allclose(out3, _adjust_saturation_ref(img3, jnp.float32(0.55)),
                             atol=1e-5, rtol=1e-5))

    # 4) Full forward (random factor + coin flip; identity branch skips kernel).
    out, label = saturation_forward(img, k_fwd, bound=0.5, p=0.5, label=None)
    out = jax.block_until_ready(out)
    assert out.shape == img.shape and out.dtype == img.dtype
    assert float(jnp.min(out)) >= 0.0 and float(jnp.max(out)) <= 1.0

    print("KERNEL_OK")
</pallas_src>

<mosaic_0001>
module attributes {stable_mosaic.version = 11 : i64} {
  func.func @_saturation_kernel(%arg0: i32, %arg1: i32, %arg2: memref<1xf32, #tpu.memory_space<smem>>, %arg3: memref<1x3x2x128xf32, #tpu.memory_space<vmem>>, %arg4: memref<1x3x2x128xf32, #tpu.memory_space<vmem>>) attributes {dimension_semantics = [#tpu.dimension_semantics<parallel>, #tpu.dimension_semantics<parallel>], iteration_bounds = array<i64: 2, 1>, scalar_prefetch = 1 : i64, scratch_operands = 0 : i64, tpu.core_type = #tpu.core_type<tc>, window_params = [{transform_indices = @transform_0, window_bounds = array<i64: 1, 3, 2, 128>}, {transform_indices = @transform_1, window_bounds = array<i64: 1, 3, 2, 128>}]} {
    %c0 = arith.constant 0 : index
    %0 = memref.load %arg2[%c0] : memref<1xf32, #tpu.memory_space<smem>>
    %c0_0 = arith.constant 0 : index
    %c0_1 = arith.constant 0 : index
    %c0_2 = arith.constant 0 : index
    %c0_3 = arith.constant 0 : index
    %1 = vector.load %arg3[%c0_0, %c0_1, %c0_2, %c0_3] : memref<1x3x2x128xf32, #tpu.memory_space<vmem>>, vector<1x1x2x128xf32>
    %2 = vector.shape_cast %1 : vector<1x1x2x128xf32> to vector<2x128xf32>
    %c0_4 = arith.constant 0 : index
    %c1 = arith.constant 1 : index
    %c0_5 = arith.constant 0 : index
    %c0_6 = arith.constant 0 : index
    %3 = vector.load %arg3[%c0_4, %c1, %c0_5, %c0_6] : memref<1x3x2x128xf32, #tpu.memory_space<vmem>>, vector<1x1x2x128xf32>
    %4 = vector.shape_cast %3 : vector<1x1x2x128xf32> to vector<2x128xf32>
    %c0_7 = arith.constant 0 : index
    %c2 = arith.constant 2 : index
    %c0_8 = arith.constant 0 : index
    %c0_9 = arith.constant 0 : index
    %5 = vector.load %arg3[%c0_7, %c2, %c0_8, %c0_9] : memref<1x3x2x128xf32, #tpu.memory_space<vmem>>, vector<1x1x2x128xf32>
    %6 = vector.shape_cast %5 : vector<1x1x2x128xf32> to vector<2x128xf32>
    %cst = arith.constant 2.989000e-01 : f32
    %7 = vector.broadcast %cst : f32 to vector<2x128xf32>
    %8 = arith.mulf %2, %7 : vector<2x128xf32>
    %cst_10 = arith.constant 5.870000e-01 : f32
    %9 = vector.broadcast %cst_10 : f32 to vector<2x128xf32>
    %10 = arith.mulf %4, %9 : vector<2x128xf32>
    %11 = arith.addf %8, %10 : vector<2x128xf32>
    %cst_11 = arith.constant 1.140000e-01 : f32
    %12 = vector.broadcast %cst_11 : f32 to vector<2x128xf32>
    %13 = arith.mulf %6, %12 : vector<2x128xf32>
    %14 = arith.addf %11, %13 : vector<2x128xf32>
    %15 = arith.subf %2, %14 : vector<2x128xf32>
    %16 = vector.broadcast %0 : f32 to vector<2x128xf32>
    %17 = arith.mulf %16, %15 : vector<2x128xf32>
    %18 = arith.addf %14, %17 : vector<2x128xf32>
    %cst_12 = arith.constant 0.000000e+00 : f32
    %cst_13 = arith.constant 1.000000e+00 : f32
    %19 = vector.broadcast %cst_12 : f32 to vector<2x128xf32>
    %20 = arith.maximumf %19, %18 : vector<2x128xf32>
    %21 = vector.broadcast %cst_13 : f32 to vector<2x128xf32>
    %22 = arith.minimumf %21, %20 : vector<2x128xf32>
    %c0_14 = arith.constant 0 : index
    %c0_15 = arith.constant 0 : index
    %c0_16 = arith.constant 0 : index
    %c0_17 = arith.constant 0 : index
    %23 = vector.load %arg4[%c0_14, %c0_15, %c0_16, %c0_17] : memref<1x3x2x128xf32, #tpu.memory_space<vmem>>, vector<1x1x2x128xf32>
    %24 = vector.shape_cast %23 : vector<1x1x2x128xf32> to vector<2x128xf32>
    %25 = vector.shape_cast %22 : vector<2x128xf32> to vector<1x1x2x128xf32>
    tpu.vector_store %arg4[%c0_14, %c0_15, %c0_16, %c0_17], %25 {strides = array<i32>} : memref<1x3x2x128xf32, #tpu.memory_space<vmem>>, vector<1x1x2x128xf32>,
    %26 = arith.subf %4, %14 : vector<2x128xf32>
    %27 = vector.broadcast %0 : f32 to vector<2x128xf32>
    %28 = arith.mulf %27, %26 : vector<2x128xf32>
    %29 = arith.addf %14, %28 : vector<2x128xf32>
    %cst_18 = arith.constant 0.000000e+00 : f32
    %cst_19 = arith.constant 1.000000e+00 : f32
    %30 = vector.broadcast %cst_18 : f32 to vector<2x128xf32>
    %31 = arith.maximumf %30, %29 : vector<2x128xf32>
    %32 = vector.broadcast %cst_19 : f32 to vector<2x128xf32>
    %33 = arith.minimumf %32, %31 : vector<2x128xf32>
    %c0_20 = arith.constant 0 : index
    %c1_21 = arith.constant 1 : index
    %c0_22 = arith.constant 0 : index
    %c0_23 = arith.constant 0 : index
    %34 = vector.load %arg4[%c0_20, %c1_21, %c0_22, %c0_23] : memref<1x3x2x128xf32, #tpu.memory_space<vmem>>, vector<1x1x2x128xf32>
    %35 = vector.shape_cast %34 : vector<1x1x2x128xf32> to vector<2x128xf32>
    %36 = vector.shape_cast %33 : vector<2x128xf32> to vector<1x1x2x128xf32>
    tpu.vector_store %arg4[%c0_20, %c1_21, %c0_22, %c0_23], %36 {strides = array<i32>} : memref<1x3x2x128xf32, #tpu.memory_space<vmem>>, vector<1x1x2x128xf32>,
    %37 = arith.subf %6, %14 : vector<2x128xf32>
    %38 = vector.broadcast %0 : f32 to vector<2x128xf32>
    %39 = arith.mulf %38, %37 : vector<2x128xf32>
    %40 = arith.addf %14, %39 : vector<2x128xf32>
    %cst_24 = arith.constant 0.000000e+00 : f32
    %cst_25 = arith.constant 1.000000e+00 : f32
    %41 = vector.broadcast %cst_24 : f32 to vector<2x128xf32>
    %42 = arith.maximumf %41, %40 : vector<2x128xf32>
    %43 = vector.broadcast %cst_25 : f32 to vector<2x128xf32>
    %44 = arith.minimumf %43, %42 : vector<2x128xf32>
    %c0_26 = arith.constant 0 : index
    %c2_27 = arith.constant 2 : index
    %c0_28 = arith.constant 0 : index
    %c0_29 = arith.constant 0 : index
    %45 = vector.load %arg4[%c0_26, %c2_27, %c0_28, %c0_29] : memref<1x3x2x128xf32, #tpu.memory_space<vmem>>, vector<1x1x2x128xf32>
    %46 = vector.shape_cast %45 : vector<1x1x2x128xf32> to vector<2x128xf32>
    %47 = vector.shape_cast %44 : vector<2x128xf32> to vector<1x1x2x128xf32>
    tpu.vector_store %arg4[%c0_26, %c2_27, %c0_28, %c0_29], %47 {strides = array<i32>} : memref<1x3x2x128xf32, #tpu.memory_space<vmem>>, vector<1x1x2x128xf32>,
    return
  }
  func.func @transform_0(%arg0: i32, %arg1: i32, %arg2: memref<1xf32, #tpu.memory_space<smem>>) -> (i32, i32, i32, i32) {
    %c0_i32 = arith.constant 0 : i32
    %c0_i32_0 = arith.constant 0 : i32
    %c0_i32_1 = arith.constant 0 : i32
    return %arg0, %c0_i32, %arg1, %c0_i32_0 : i32, i32, i32, i32
  }
  func.func @transform_1(%arg0: i32, %arg1: i32, %arg2: memref<1xf32, #tpu.memory_space<smem>>) -> (i32, i32, i32, i32) {
    %c0_i32 = arith.constant 0 : i32
    %c0_i32_0 = arith.constant 0 : i32
    %c0_i32_1 = arith.constant 0 : i32
    return %arg0, %c0_i32, %arg1, %c0_i32_0 : i32, i32, i32, i32
  }
}

</mosaic_0001>

<llo_original>
// kernel: tpu_custom_call.1
$region0: #{tpu_custom_call.1}
  #allocation0 [shape = 'u32[]', space=smem, size = 0x4, offset = 0x4, fixed_abs, tag = 'smem constant byte address 0x4 - core index']
  #allocation1 [shape = 'u32[144,128]{1,0:T(1,128)}', space=vmem, size = 0x12000, scoped, tag = 'internal scratch']
  #allocation2 [shape = 's32[1]{0}', space=sflag, size = 0x4, scoped, tag = 'scoped memory for tpu_custom_call.1']
  #allocation3 [shape = 'f32[1]{0:T(128)S(6)}', space=smem, size = 0x200, scoped, tag = 'prefetched SMEM operand 0']
  %s0 = inlined_call_operand.<no memory space> [shape: f32[1], index: 0, kind: input, shape index: {}]
  %s1 = inlined_call_operand.hbm [shape: f32[2,3,2,128], index: 1, kind: input, shape index: {}]
  %s2 = inlined_call_operand.hbm [shape: f32[2,3,2,128], index: 2, kind: output, shape index: {}]
  %s3 = sld [smem:[#allocation0]]
  $region41: #{tpu_custom_call.1} parent=0
    _
  %s5 = ssub.s32 1, %s3
  %s6 = scalar_select 0, %s5, %s3
  %7 = sst [smem:[#allocation3]] %s0
  $region1: #{tpu_custom_call.1} parent=0
    #allocation4 [shape = 'u8[6144]{0}', space=vmem, size = 0x1800, scoped, tag = 'input window, operand 1']
    #allocation5 [shape = 's32[2]{0}', space=sflag, size = 0x8, scoped, tag = 'scoped memory for tpu_custom_call.1']
    #allocation6 [shape = 's32[2]{0}', space=sflag, size = 0x8, scoped, tag = 'scoped memory for tpu_custom_call.1']
    #allocation7 [shape = 'u8[6144]{0}', space=vmem, size = 0x1800, scoped, tag = 'output window, operand 0']
    %8 = vsyncpa [#allocation5], 0
    %s9 = scalar_lea.sflag [#allocation5], 1
    %10 = vsyncpa %s9, 0
    %11 = vsyncpa [#allocation6], 0
    %s12 = scalar_lea.sflag [#allocation6], 1
    %13 = vsyncpa %s12, 0
    loop: start=0, step=1, limit=4
    $region2: #{tpu_custom_call.1} parent=1 // loop_pre_header
      _
    $region3: #{tpu_custom_call.1} parent=1 // loop_header
      %s15 = sphi 0, %s19
      %p16 = scmp.ge.s32.totalorder %s15, 4
      %s22 = sphi 0, %s34
      %s23 = sphi 0, %s30
      %s24 = sphi 0, %s22
      %s25 = sphi 0, %s23
      %s26 = sphi 0, %s24
      %s27 = sphi 0, %s25
      %s39 = sphi 0, %s41
      %s42 = sphi 0, %s39
      %s43 = sphi 0, %s42
      %s59 = sphi 0, %s43
      %s67 = sphi 0, %s69
      %s70 = sphi 0, %s67
      %s71 = sphi 0, %s70
      %s87 = sphi 0, %s71
    $region4: #{tpu_custom_call.1} parent=1 // loop_header_branch
      %18 = sbr.rel (%p16) target = $region8
    $region5: #{tpu_custom_call.1} parent=1 // loop_body
      %s20 = ssub.s32 %s15, 1
      %s21 = ssub.s32 %s15, 2
      %s28 = sadd.s32 1, %s23
      %p29 = scmp.ge.s32.totalorder %s28, 1
      %s30 = scalar_select %p29, 0, %s28
      %s31 = sadd.s32 1, %s22
      %s32 = scalar_select %p29, %s31, %s22
      %p33 = scmp.ge.s32.totalorder %s32, 2
      %s34 = scalar_select %p33, 0, %s32
      %s35 = ssub.s32 %s22, %s34
      %s36 = ssub.s32 %s23, %s30
      %s37 = sor.u32 %s35, %s36
      %p38 = scmp.eq.s32.totalorder %s37, 0
      %s40 = sadd.s32 %s39, 1
      %s41 = scalar_select %p38, %s39, %s40
      %p44 = pneg %p38
      %p45 = scmp.eq.s32.totalorder %s15, 1
      %p46 = por %p44, %p45
      %p47 = scmp.ne.s32.totalorder %s39, %s42
      %p48 = scmp.eq.s32.totalorder %s15, 0
      %p49 = por %p47, %p48
      %p50 = scmp.ne.s32.totalorder %s39, %s42
      %p51 = scmp.eq.s32.totalorder %s20, 1
      %p52 = por %p50, %p51
      %p53 = scmp.ne.s32.totalorder %s42, %s43
      %p54 = scmp.eq.s32.totalorder %s20, 0
      %p55 = por %p53, %p54
      %p56 = scmp.ne.s32.totalorder %s42, %s43
      %p57 = scmp.eq.s32.totalorder %s21, 1
      %p58 = por %p56, %p57
      %p60 = scmp.ne.s32.totalorder %s43, %s59
      %p61 = scmp.eq.s32.totalorder %s21, 0
      %p62 = por %p60, %p61
      %s63 = ssub.s32 %s22, %s34
      %s64 = ssub.s32 %s23, %s30
      %s65 = sor.u32 %s63, %s64
      %p66 = scmp.eq.s32.totalorder %s65, 0
      %s68 = sadd.s32 %s67, 1
      %s69 = scalar_select %p66, %s67, %s68
      %p72 = pneg %p66
      %p73 = scmp.eq.s32.totalorder %s15, 1
      %p74 = por %p72, %p73
      %p75 = scmp.ne.s32.totalorder %s67, %s70
      %p76 = scmp.eq.s32.totalorder %s15, 0
      %p77 = por %p75, %p76
      %p78 = scmp.ne.s32.totalorder %s67, %s70
      %p79 = scmp.eq.s32.totalorder %s20, 1
      %p80 = por %p78, %p79
      %p81 = scmp.ne.s32.totalorder %s70, %s71
      %p82 = scmp.eq.s32.totalorder %s20, 0
      %p83 = por %p81, %p82
      %p84 = scmp.ne.s32.totalorder %s70, %s71
      %p85 = scmp.eq.s32.totalorder %s21, 1
      %p86 = por %p84, %p85
      %p88 = scmp.ne.s32.totalorder %s71, %s87
      %p89 = scmp.eq.s32.totalorder %s21, 0
      %p90 = por %p88, %p89
      %p91 = scmp.le.s32.totalorder 1, %s15
      %p92 = scmp.lt.s32.totalorder %s15, 3
      %p93 = pnand %p91, %p92
      %p94 = pneg %p93
      // Predicated region
      $region9: #{tpu_custom_call.1} parent=5 // pred_check
        _
      $region10: #{tpu_custom_call.1} parent=5 // pred_check_branch
        %96 = sbr.rel (%p93) target = $region12
      $region11: #{tpu_custom_call.1} parent=5 // pred_region
        %s97 = ssub.s32 %s15, 1
      $region12: #{tpu_custom_call.1} parent=5 // pred_fallthru
        _
      %p98 = scmp.lt.s32.totalorder %s15, 2
      // Predicated region
      $region13: #{tpu_custom_call.1} parent=5 // pred_check
        %p99 = pneg %p98
      $region14: #{tpu_custom_call.1} parent=5 // pred_check_branch
        %101 = sbr.rel (%p99) target = $region16
      $region15: #{tpu_custom_call.1} parent=5 // pred_region
        // Predicated region
        $region17: #{tpu_custom_call.1} parent=15 // pred_check
          %p102 = pneg %p49
        $region18: #{tpu_custom_call.1} parent=15 // pred_check_branch
          %104 = sbr.rel (%p102) target = $region20
        $region19: #{tpu_custom_call.1} parent=15 // pred_region
          %s105 = sand.u32 %s39, 1
          %s106 = scalar_lea.sflag [#allocation5], %s105
          %s107 = sand.u32 %s39, 1
          %s108 = smul.addr %s107, 6
          %s109 = scalar_lea.vmem [#allocation4], %s108
          %s111 = ssub.s32 96, 96
          %112 = vsyncadd %s106, %s111
          %s113 = smul.addr %s22, 3
          %s114 = sadd.s32 %s23, %s113
          %s115 = smul.addr %s114, 32
          %s116 = scalar_lea.hbm %s1, %s115
          %s117 = sshll.u32 %s109, 4
          %s118 = int_to_ptr.vmem [resolvable:$true] %s117
          %123 = dma.hbm_to_vmem [thread:$0]  %s116, 96, %s118, %s106, 32, 32, 2
        $region20: #{tpu_custom_call.1} parent=15 // pred_fallthru
          _
      $region16: #{tpu_custom_call.1} parent=5 // pred_fallthru
        _
      %p124 = scmp.le.s32.totalorder 1, %s15
      %p125 = scmp.lt.s32.totalorder %s15, 3
      %p126 = pnand %p124, %p125
      %p127 = pneg %p126
      // Predicated region
      $region21: #{tpu_custom_call.1} parent=5 // pred_check
        _
      $region22: #{tpu_custom_call.1} parent=5 // pred_check_branch
        %129 = sbr.rel (%p126) target = $region24
      $region23: #{tpu_custom_call.1} parent=5 // pred_region
        %s130 = ssub.s32 %s15, 1
        %s131 = sand.u32 %s42, 1
        %s132 = scalar_lea.sflag [#allocation5], %s131
        %s133 = sand.u32 %s42, 1
        %s134 = smul.addr %s133, 6
        %s135 = scalar_lea.vmem [#allocation4], %s134
        // Predicated region
        $region25: #{tpu_custom_call.1} parent=23 // pred_check
          %p136 = pneg %p55
        $region26: #{tpu_custom_call.1} parent=23 // pred_check_branch
          %138 = sbr.rel (%p136) target = $region28
        $region27: #{tpu_custom_call.1} parent=23 // pred_region
          %139 = dma.done %s132, 96
        $region28: #{tpu_custom_call.1} parent=23 // pred_fallthru
          _
        %s140 = sand.u32 %s42, 1
        %s141 = scalar_lea.sflag [#allocation5], %s140
        %s142 = sand.u32 %s42, 1
        %s143 = smul.addr %s142, 6
        %s144 = scalar_lea.vmem [#allocation4], %s143
        %p145 = pneg %p55
        %p146 = pneg %p52
        %p147 = pneg %p83
        %p148 = pneg %p80
        %s149 = sand.u32 %s70, 1
        %s150 = scalar_lea.sflag [#allocation6], %s149
        %s151 = sand.u32 %s70, 1
        %s152 = smul.addr %s151, 6
        %s153 = scalar_lea.vmem [#allocation7], %s152
        %s154 = sld [smem:[#allocation3]]
        %v155 = vld [vmem:[%s135] sm:$0x3]
        %s156 = scalar_lea.vmem %s135, 2 [#allocation4]
        %v157 = vld [vmem:[%s156] sm:$0x3]
        %s158 = scalar_lea.vmem %s135, 4 [#allocation4]
        %v159 = vld [vmem:[%s158] sm:$0x3]
        %v160 = vmul.f32 %v155, 0.2989
        %v161 = vmul.f32 %v157, 0.587
        %v162 = vadd.f32 %v160, %v161
        %v163 = vmul.f32 %v159, 0.114
        %v164 = vadd.f32 %v162, %v163
        %v165 = vsub.f32 %v155, %v164
        %v166 = vstv %s154
        %v167 = vmul.f32 %v166, %v165
        %v168 = vadd.f32 %v164, %v167
        %v169 = vmax.f32 %v168, 0.0
        %v170 = vmin.f32 %v169, 1.0
        %171 = vst [vmem:[%s153] sm:$0x3] %v170
        %v172 = vsub.f32 %v157, %v164
        %v173 = vmul.f32 %v166, %v172
        %v174 = vadd.f32 %v164, %v173
        %v175 = vmax.f32 %v174, 0.0
        %v176 = vmin.f32 %v175, 1.0
        %s177 = scalar_lea.vmem %s153, 2 [#allocation7]
        %178 = vst [vmem:[%s177] sm:$0x3] %v176
        %v179 = vsub.f32 %v159, %v164
        %v180 = vmul.f32 %v166, %v179
        %v181 = vadd.f32 %v164, %v180
        %v182 = vmax.f32 %v181, 0.0
        %v183 = vmin.f32 %v182, 1.0
        %s184 = scalar_lea.vmem %s153, 4 [#allocation7]
        %185 = vst [vmem:[%s184] sm:$0x3] %v183
        %s186 = sand.u32 %s70, 1
        %s187 = scalar_lea.sflag [#allocation6], %s186
        %s188 = sand.u32 %s70, 1
        %s189 = smul.addr %s188, 6
        %s190 = scalar_lea.vmem [#allocation7], %s189
        // Predicated region
        $region29: #{tpu_custom_call.1} parent=23 // pred_check
          %p191 = pneg %p80
        $region30: #{tpu_custom_call.1} parent=23 // pred_check_branch
          %193 = sbr.rel (%p191) target = $region32
        $region31: #{tpu_custom_call.1} parent=23 // pred_region
          %s195 = ssub.s32 96, 96
          %196 = vsyncadd %s187, %s195
          %s197 = smul.addr %s24, 3
          %s198 = sadd.s32 %s25, %s197
          %s199 = smul.addr %s198, 32
          %s200 = scalar_lea.hbm %s2, %s199
          %s201 = sshll.u32 %s190, 4
          %s202 = int_to_ptr.vmem [resolvable:$true] %s201
          %207 = dma.vmem_to_hbm [thread:$0]  %s202, 96, %s200, %s187, 32, 32, 2
        $region32: #{tpu_custom_call.1} parent=23 // pred_fallthru
          _
      $region24: #{tpu_custom_call.1} parent=5 // pred_fallthru
        _
      %p208 = scmp.le.s32.totalorder 2, %s15
      // Predicated region
      $region33: #{tpu_custom_call.1} parent=5 // pred_check
        %p209 = pneg %p208
      $region34: #{tpu_custom_call.1} parent=5 // pred_check_branch
        %211 = sbr.rel (%p209) target = $region36
      $region35: #{tpu_custom_call.1} parent=5 // pred_region
        %s212 = ssub.s32 %s15, 2
        // Predicated region
        $region37: #{tpu_custom_call.1} parent=35 // pred_check
          %p213 = pneg %p86
        $region38: #{tpu_custom_call.1} parent=35 // pred_check_branch
          %215 = sbr.rel (%p213) target = $region40
        $region39: #{tpu_custom_call.1} parent=35 // pred_region
          %s216 = sand.u32 %s71, 1
          %s217 = scalar_lea.sflag [#allocation6], %s216
          %s218 = sand.u32 %s71, 1
          %s219 = smul.addr %s218, 6
          %s220 = scalar_lea.vmem [#allocation7], %s219
          %221 = dma.done %s217, 96
        $region40: #{tpu_custom_call.1} parent=35 // pred_fallthru
          _
      $region36: #{tpu_custom_call.1} parent=5 // pred_fallthru
        _
    $region6: #{tpu_custom_call.1} parent=1 // loop_footer
      %s19 = sadd.s32 1, %s15
    $region7: #{tpu_custom_call.1} parent=1 // loop_footer_branch
      %14 = sbr.rel target = $region3
    $region8: #{tpu_custom_call.1} parent=1 // loop_exit
      _
    %222 = vsyncpa [#allocation5], 1
    %s223 = scalar_lea.sflag [#allocation5], 1
    %224 = vsyncpa %s223, 1
    %225 = vsyncpa [#allocation6], 1
    %s226 = scalar_lea.sflag [#allocation6], 1
    %227 = vsyncpa %s226, 1

</llo_original>
